<compile_context>
chip_gen: v5e
topology: v5e:2x2
jax: 0.10.0
libtpu: 0.0.40
codegen_flags: <defaults>
</compile_context>

<pallas_src>
import functools

import jax
import jax.numpy as jnp
from jax.experimental import pallas as pl
from jax.experimental.pallas import tpu as pltpu


_SQRT_2_OVER_PI = 0.7978845608028654


def _gelu_tanh(x):
    # Same formula as nn.GELU(approximate='tanh'); kept in f32 (works on v5e).
    return 0.5 * x * (1.0 + jnp.tanh(_SQRT_2_OVER_PI * (x + 0.044715 * x * x * x)))


def _round_up(a, b):
    return (a + b - 1) // b * b


# ---------------------------------------------------------------------------
# Kernels
# ---------------------------------------------------------------------------

def mlp_kernel_resident(x_ref, wfc_ref, bfc_ref, wproj_ref, bproj_ref, o_ref):
    """Whole hidden dim resident in VMEM: compute straight into o_ref."""
    x = x_ref[...].astype(jnp.bfloat16)
    h = jnp.dot(x, wfc_ref[...], preferred_element_type=jnp.float32)
    h = h + bfc_ref[...]                                   # f32 bias add
    g = _gelu_tanh(h).astype(jnp.bfloat16)                 # f32 GELU, bf16 out
    y = jnp.dot(g, wproj_ref[...], preferred_element_type=jnp.float32)
    o_ref[...] = (y + bproj_ref[...]).astype(o_ref.dtype)


def mlp_kernel_tiled(x_ref, wfc_ref, bfc_ref, wproj_ref, bproj_ref, o_ref,
                     acc_ref):
    """Hidden dim tiled on grid axis 1 ('arbitrary'); f32 accumulator scratch."""
    j = pl.program_id(1)
    x = x_ref[...].astype(jnp.bfloat16)
    h = jnp.dot(x, wfc_ref[...], preferred_element_type=jnp.float32)
    h = h + bfc_ref[...]
    g = _gelu_tanh(h).astype(jnp.bfloat16)
    partial = jnp.dot(g, wproj_ref[...], preferred_element_type=jnp.float32)

    @pl.when(j == 0)
    def _():
        # Fold the projection bias into the accumulator init: no zero-init
        # store pass and no final bias-add pass.
        acc_ref[...] = partial + bproj_ref[...]

    @pl.when(j > 0)
    def _():
        acc_ref[...] += partial

    @pl.when(j == pl.num_programs(1) - 1)
    def _():
        o_ref[...] = acc_ref[...].astype(o_ref.dtype)


# ---------------------------------------------------------------------------
# Eager (outside-jit) planning helpers
# ---------------------------------------------------------------------------

@functools.lru_cache(maxsize=None)
def _vmem_capacity_bytes():
    try:
        cap = int(pltpu.get_tpu_info().vmem_capacity_bytes)
        if cap > 0:
            return cap
    except Exception:
        pass
    return 64 * 1024 * 1024          # conservative default (v7x per-TC VMEM)


@functools.lru_cache(maxsize=None)
def _single_buffer_supported():
    """Probe (eagerly, never under jit) whether pipeline_mode=pl.Buffered(1)
    lowers on this JAX/TPU combination."""
    if not hasattr(pl, "Buffered"):
        return False
    try:
        def _copy(x_ref, o_ref):
            o_ref[...] = x_ref[...]

        y = pl.pallas_call(
            _copy,
            out_shape=jax.ShapeDtypeStruct((8, 128), jnp.float32),
            grid=(2,),
            in_specs=[pl.BlockSpec((8, 128), lambda i: (0, 0),
                                   pipeline_mode=pl.Buffered(1))],
            out_specs=pl.BlockSpec((8, 128), lambda i: (0, 0)),
        )(jnp.zeros((8, 128), jnp.float32))
        jax.block_until_ready(y)
        return True
    except Exception:
        return False


def _plan(M, E, H, x_itemsize, out_itemsize):
    """Pick row tile tm, hidden tile th, padded dims and vmem limit. Eager."""
    vmem_cap = _vmem_capacity_bytes()
    budget = int(0.65 * vmem_cap)          # full-working-set budget
    vmem_limit = int(0.85 * vmem_cap)      # never above physical VMEM

    E_pad = _round_up(E, 128)
    H_pad0 = _round_up(H, 128)
    single_buf = _single_buffer_supported()

    def weight_bytes(th, wbuf):
        # bf16 W_fc + W_proj tiles + sublane-padded f32 bias tiles.
        return wbuf * (2 * (2 * E_pad * th) + 8 * 4 * th + 8 * 4 * E_pad)

    def per_row_bytes(th):
        # per row of the tm tile: double-buffered x (worst case f32),
        # double-buffered out, f32 accumulator, f32 h/g + bf16 g intermediates.
        return (2 * E_pad * x_itemsize + 2 * E_pad * out_itemsize
                + 4 * E_pad + th * (4 + 4 + 2))

    # Row-tile target: clear the weight-restream ridge when weights are not
    # resident (~640 FLOP/B on v6e, ~310 v7x, ~240 v5e).
    tm_target = 768 if vmem_cap >= 96 * 1024 * 1024 else 512
    tm_max = max(16, min(tm_target, _round_up(M, 16)))
    tm_min = min(64, tm_max)

    def shrink_tm(t):
        return max(tm_min, _round_up(t // 2, 16))

    # --- resident path: whole H in VMEM, weights DMA'd exactly once ---------
    wbuf_res = 1 if single_buf else 2
    wb_res = weight_bytes(H_pad0, wbuf_res)
    if wb_res <= budget:
        tm = tm_max
        while tm > tm_min and wb_res + tm * per_row_bytes(H_pad0) > budget:
            tm = shrink_tm(tm)
        if wb_res + tm * per_row_bytes(H_pad0) <= budget:
            return dict(tm=tm, th=H_pad0, E_pad=E_pad, H_pad=H_pad0,
                        vmem_limit=vmem_limit, single_buf=single_buf)

    # --- tiled path: keep tm as large as possible, shrink th to fit ---------
    tm = tm_max
    while True:
        th_cap = H_pad0
        while (th_cap > 512
               and weight_bytes(th_cap, 2) + tm * per_row_bytes(th_cap) > budget):
            th_cap = max(512, _round_up(th_cap // 2, 512))
        th_cap = min(th_cap, H_pad0)
        if (weight_bytes(th_cap, 2) + tm * per_row_bytes(th_cap) <= budget
                or tm <= tm_min):
            break
        tm = shrink_tm(tm)

    n_ht = pl.cdiv(H_pad0, th_cap)
    th = _round_up(pl.cdiv(H_pad0, n_ht), 128)   # 128-multiple, th*n_ht >= H
    H_pad = th * n_ht
    return dict(tm=tm, th=th, E_pad=E_pad, H_pad=H_pad,
                vmem_limit=vmem_limit, single_buf=single_buf)


# ---------------------------------------------------------------------------
# Jitted implementation + public wrapper
# ---------------------------------------------------------------------------

@functools.partial(
    jax.jit,
    static_argnames=("tm", "th", "E_pad", "H_pad", "M_pad", "vmem_limit",
                     "single_buf"))
def _mlp_impl(x2d, w_fc_t, b_fc, w_proj_t, b_proj, *, tm, th, E_pad, H_pad,
              M_pad, vmem_limit, single_buf):
    M, E = x2d.shape
    H = w_fc_t.shape[1]
    out_dtype = x2d.dtype
    n_ht = H_pad // th
    n_rt = M_pad // tm

    # Weights are (possibly) restreamed -> bf16 halves their HBM traffic.
    # x is only pre-cast here when padding already forces a copy; otherwise it
    # goes to the kernel unchanged and is cast on-tile (free VPU slot).
    if (M_pad > M) or (E_pad > E):
        x_p = jnp.pad(x2d.astype(jnp.bfloat16),
                      ((0, M_pad - M), (0, E_pad - E)))
    else:
        x_p = x2d
    wfc = jnp.pad(w_fc_t.astype(jnp.bfloat16),
                  ((0, E_pad - E), (0, H_pad - H)))
    wproj = jnp.pad(w_proj_t.astype(jnp.bfloat16),
                    ((0, H_pad - H), (0, E_pad - E)))
    bfc = jnp.pad(b_fc.astype(jnp.float32), (0, H_pad - H)).reshape(1, H_pad)
    bproj = jnp.pad(b_proj.astype(jnp.float32), (0, E_pad - E)).reshape(1, E_pad)

    x_itemsize = jnp.dtype(x_p.dtype).itemsize
    out_itemsize = jnp.dtype(out_dtype).itemsize
    w_streams = 1 if n_ht == 1 else n_rt
    cost = pl.CostEstimate(
        flops=int(4 * M_pad * E_pad * H_pad),
        transcendentals=int(M_pad * H_pad),
        bytes_accessed=int(M_pad * E_pad * (x_itemsize + out_itemsize)
                           + w_streams * (2 * E_pad * H_pad * 2)
                           + 4 * (H_pad + E_pad)),
    )

    def wspec(shape, index_map):
        # Constant-index weight/bias blocks: single-buffer when supported and
        # fully resident (halves weight-resident VMEM).
        if single_buf and n_ht == 1:
            return pl.BlockSpec(shape, index_map, pipeline_mode=pl.Buffered(1))
        return pl.BlockSpec(shape, index_map)

    if n_ht == 1:
        grid = (n_rt,)
        in_specs = [
            pl.BlockSpec((tm, E_pad), lambda i: (i, 0)),        # x row tile
            wspec((E_pad, H_pad), lambda i: (0, 0)),            # W_fc^T
            wspec((1, H_pad), lambda i: (0, 0)),                # b_fc
            wspec((H_pad, E_pad), lambda i: (0, 0)),            # W_proj^T
            wspec((1, E_pad), lambda i: (0, 0)),                # b_proj
        ]
        out_specs = pl.BlockSpec((tm, E_pad), lambda i: (i, 0))
        scratch = []
        kernel = mlp_kernel_resident
        dims = ("parallel",)
    else:
        grid = (n_rt, n_ht)                                     # rows, hidden
        in_specs = [
            pl.BlockSpec((tm, E_pad), lambda i, j: (i, 0)),     # x row tile
            pl.BlockSpec((E_pad, th), lambda i, j: (0, j)),     # W_fc^T tile
            pl.BlockSpec((1, th), lambda i, j: (0, j)),         # b_fc tile
            pl.BlockSpec((th, E_pad), lambda i, j: (j, 0)),     # W_proj^T tile
            pl.BlockSpec((1, E_pad), lambda i, j: (0, 0)),      # b_proj (const)
        ]
        out_specs = pl.BlockSpec((tm, E_pad), lambda i, j: (i, 0))
        scratch = [pltpu.VMEM((tm, E_pad), jnp.float32)]
        kernel = mlp_kernel_tiled
        dims = ("parallel", "arbitrary")
    # TODO(synk): on v7x, try dimension_semantics=(pltpu.CORE_PARALLEL, ...) to
    # shard the row axis across both TensorCores.

    out2d = pl.pallas_call(
        kernel,
        out_shape=jax.ShapeDtypeStruct((M_pad, E_pad), out_dtype),
        grid_spec=pltpu.PrefetchScalarGridSpec(
            num_scalar_prefetch=0,
            grid=grid,
            in_specs=in_specs,
            out_specs=out_specs,
            scratch_shapes=scratch,
        ),
        compiler_params=pltpu.CompilerParams(
            dimension_semantics=dims,
            vmem_limit_bytes=vmem_limit,
        ),
        cost_estimate=cost,
    )(x_p, wfc, bfc, wproj, bproj)

    return out2d[:M, :E]


def mlp_forward(x, w_fc_t, b_fc, w_proj_t, b_proj):
    """GPT-2 MLP forward.  x: (B, T, n_embd); weights pre-transposed (in, out).
    Returns (B, T, n_embd) in x.dtype."""
    B, T, E = x.shape
    H = w_fc_t.shape[1]
    M = B * T

    itemsize = jnp.dtype(x.dtype).itemsize
    plan = _plan(M, E, H, x_itemsize=itemsize, out_itemsize=itemsize)
    tm = plan["tm"]
    M_pad = _round_up(M, tm)

    out2d = _mlp_impl(
        x.reshape(M, E), w_fc_t, b_fc, w_proj_t, b_proj,
        tm=tm, th=plan["th"], E_pad=plan["E_pad"], H_pad=plan["H_pad"],
        M_pad=M_pad, vmem_limit=plan["vmem_limit"],
        single_buf=plan["single_buf"])
    return out2d.reshape(B, T, E)


def _reference_mlp(x, w_fc_t, b_fc, w_proj_t, b_proj):
    h = x @ w_fc_t + b_fc
    g = _gelu_tanh(h)
    return g @ w_proj_t + b_proj


if __name__ == "__main__":
    # Small, MLP-consistent shapes: batch=2, seq=8, n_embd=32 -> hidden=128.
    B, T, E = 2, 8, 32
    H = 4 * E

    key = jax.random.PRNGKey(0)
    kx, kwf, kbf, kwp, kbp = jax.random.split(key, 5)

    x = jax.random.normal(kx, (B, T, E), dtype=jnp.float32)
    # PyTorch Linear stores (out, in); we pass the transpose (in, out).
    w_fc_t = 0.02 * jax.random.normal(kwf, (E, H), dtype=jnp.float32)    # c_fc.weight.T
    b_fc = 0.01 * jax.random.normal(kbf, (H,), dtype=jnp.float32)        # c_fc.bias
    w_proj_t = 0.02 * jax.random.normal(kwp, (H, E), dtype=jnp.float32)  # c_proj.weight.T
    b_proj = 0.01 * jax.random.normal(kbp, (E,), dtype=jnp.float32)      # c_proj.bias

    out = mlp_forward(x, w_fc_t, b_fc, w_proj_t, b_proj)
    out = jax.block_until_ready(out)

    ref = _reference_mlp(x.reshape(-1, E), w_fc_t, b_fc,
                         w_proj_t, b_proj).reshape(B, T, E)
    assert out.shape == (B, T, E)
    assert out.dtype == x.dtype
    # bf16 MXU operands (f32 accumulation) -> loosened tolerance vs f32 ref.
    assert jnp.allclose(out, ref, atol=2e-2, rtol=2e-2), "mismatch vs reference"

    print("KERNEL_OK")
</pallas_src>

<mosaic_0001>
module attributes {stable_mosaic.version = 11 : i64} {
  func.func @_copy(%arg0: i32, %arg1: memref<8x128xf32, #tpu.memory_space<vmem>>, %arg2: memref<8x128xf32, #tpu.memory_space<vmem>>) attributes {dimension_semantics = [#tpu.dimension_semantics<arbitrary>], iteration_bounds = array<i64: 2>, scalar_prefetch = 0 : i64, scratch_operands = 0 : i64, tpu.core_type = #tpu.core_type<tc>, window_params = [{pipeline_mode = #tpu.pipeline_mode<synchronous>, transform_indices = @transform_0, window_bounds = array<i64: 8, 128>}, {pipeline_mode = #tpu.pipeline_mode<synchronous>, transform_indices = @transform_1, window_bounds = array<i64: 8, 128>}]} {
    %c0 = arith.constant 0 : index
    %c0_0 = arith.constant 0 : index
    %0 = vector.load %arg1[%c0, %c0_0] : memref<8x128xf32, #tpu.memory_space<vmem>>, vector<8x128xf32>
    %c0_1 = arith.constant 0 : index
    %c0_2 = arith.constant 0 : index
    %1 = vector.load %arg2[%c0_1, %c0_2] : memref<8x128xf32, #tpu.memory_space<vmem>>, vector<8x128xf32>
    tpu.vector_store %arg2[%c0_1, %c0_2], %0 {strides = array<i32>} : memref<8x128xf32, #tpu.memory_space<vmem>>, vector<8x128xf32>,
    return
  }
  func.func @transform_0(%arg0: i32) -> (i32, i32) {
    %c0_i32 = arith.constant 0 : i32
    %c0_i32_0 = arith.constant 0 : i32
    %c0_i32_1 = arith.constant 0 : i32
    return %c0_i32, %c0_i32_0 : i32, i32
  }
  func.func @transform_1(%arg0: i32) -> (i32, i32) {
    %c0_i32 = arith.constant 0 : i32
    %c0_i32_0 = arith.constant 0 : i32
    %c0_i32_1 = arith.constant 0 : i32
    return %c0_i32, %c0_i32_0 : i32, i32
  }
}

module attributes {stable_mosaic.version = 11 : i64} {
  func.func @mlp_kernel_resident(%arg0: i32, %arg1: memref<16x128xbf16, #tpu.memory_space<vmem>>, %arg2: memref<128x128xbf16, #tpu.memory_space<vmem>>, %arg3: memref<1x128xf32, #tpu.memory_space<vmem>>, %arg4: memref<128x128xbf16, #tpu.memory_space<vmem>>, %arg5: memref<1x128xf32, #tpu.memory_space<vmem>>, %arg6: memref<16x128xf32, #tpu.memory_space<vmem>>) attributes {dimension_semantics = [#tpu.dimension_semantics<parallel>], iteration_bounds = array<i64: 1>, scalar_prefetch = 0 : i64, scratch_operands = 0 : i64, tpu.core_type = #tpu.core_type<tc>, window_params = [{transform_indices = @transform_0, window_bounds = array<i64: 16, 128>}, {pipeline_mode = #tpu.pipeline_mode<synchronous>, transform_indices = @transform_1, window_bounds = array<i64: 128, 128>}, {pipeline_mode = #tpu.pipeline_mode<synchronous>, transform_indices = @transform_2, window_bounds = array<i64: 1, 128>}, {pipeline_mode = #tpu.pipeline_mode<synchronous>, transform_indices = @transform_3, window_bounds = array<i64: 128, 128>}, {pipeline_mode = #tpu.pipeline_mode<synchronous>, transform_indices = @transform_4, window_bounds = array<i64: 1, 128>}, {transform_indices = @transform_5, window_bounds = array<i64: 16, 128>}]} {
    %c0 = arith.constant 0 : index
    %c0_0 = arith.constant 0 : index
    %0 = vector.load %arg1[%c0, %c0_0] : memref<16x128xbf16, #tpu.memory_space<vmem>>, vector<16x128xbf16>
    %c0_1 = arith.constant 0 : index
    %c0_2 = arith.constant 0 : index
    %1 = vector.load %arg2[%c0_1, %c0_2] : memref<128x128xbf16, #tpu.memory_space<vmem>>, vector<128x128xbf16>
    %cst = arith.constant dense<0.000000e+00> : vector<16x128xf32>
    %2 = tpu.matmul %0, %1, %cst {dimension_numbers = #tpu.dot_dimension_numbers<[1], [0], [0], [1], [0, 0, 1, 1], [], []>} : vector<16x128xbf16>, vector<128x128xbf16>, vector<16x128xf32> -> vector<16x128xf32>
    %c0_3 = arith.constant 0 : index
    %c0_4 = arith.constant 0 : index
    %3 = vector.load %arg3[%c0_3, %c0_4] : memref<1x128xf32, #tpu.memory_space<vmem>>, vector<1x128xf32>
    %4 = vector.broadcast %3 : vector<1x128xf32> to vector<16x128xf32>
    %5 = arith.addf %2, %4 : vector<16x128xf32>
    %cst_5 = arith.constant 5.000000e-01 : f32
    %6 = vector.broadcast %cst_5 : f32 to vector<16x128xf32>
    %7 = arith.mulf %6, %5 : vector<16x128xf32>
    %cst_6 = arith.constant 4.471500e-02 : f32
    %8 = vector.broadcast %cst_6 : f32 to vector<16x128xf32>
    %9 = arith.mulf %8, %5 : vector<16x128xf32>
    %10 = arith.mulf %9, %5 : vector<16x128xf32>
    %11 = arith.mulf %10, %5 : vector<16x128xf32>
    %12 = arith.addf %5, %11 : vector<16x128xf32>
    %cst_7 = arith.constant 0.797884583 : f32
    %13 = vector.broadcast %cst_7 : f32 to vector<16x128xf32>
    %14 = arith.mulf %13, %12 : vector<16x128xf32>
    %15 = math.tanh %14 : vector<16x128xf32>
    %cst_8 = arith.constant 1.000000e+00 : f32
    %16 = vector.broadcast %cst_8 : f32 to vector<16x128xf32>
    %17 = arith.addf %16, %15 : vector<16x128xf32>
    %18 = arith.mulf %7, %17 : vector<16x128xf32>
    %19 = arith.truncf %18 : vector<16x128xf32> to vector<16x128xbf16>
    %c0_9 = arith.constant 0 : index
    %c0_10 = arith.constant 0 : index
    %20 = vector.load %arg4[%c0_9, %c0_10] : memref<128x128xbf16, #tpu.memory_space<vmem>>, vector<128x128xbf16>
    %cst_11 = arith.constant dense<0.000000e+00> : vector<16x128xf32>
    %21 = tpu.matmul %19, %20, %cst_11 {dimension_numbers = #tpu.dot_dimension_numbers<[1], [0], [0], [1], [0, 0, 1, 1], [], []>} : vector<16x128xbf16>, vector<128x128xbf16>, vector<16x128xf32> -> vector<16x128xf32>
    %c0_12 = arith.constant 0 : index
    %c0_13 = arith.constant 0 : index
    %22 = vector.load %arg5[%c0_12, %c0_13] : memref<1x128xf32, #tpu.memory_space<vmem>>, vector<1x128xf32>
    %23 = vector.broadcast %22 : vector<1x128xf32> to vector<16x128xf32>
    %24 = arith.addf %21, %23 : vector<16x128xf32>
    %c0_14 = arith.constant 0 : index
    %c0_15 = arith.constant 0 : index
    %25 = vector.load %arg6[%c0_14, %c0_15] : memref<16x128xf32, #tpu.memory_space<vmem>>, vector<16x128xf32>
    tpu.vector_store %arg6[%c0_14, %c0_15], %24 {strides = array<i32>} : memref<16x128xf32, #tpu.memory_space<vmem>>, vector<16x128xf32>,
    return
  }
  func.func @transform_0(%arg0: i32) -> (i32, i32) {
    %c0_i32 = arith.constant 0 : i32
    %c0_i32_0 = arith.constant 0 : i32
    return %arg0, %c0_i32 : i32, i32
  }
  func.func @transform_1(%arg0: i32) -> (i32, i32) {
    %c0_i32 = arith.constant 0 : i32
    %c0_i32_0 = arith.constant 0 : i32
    %c0_i32_1 = arith.constant 0 : i32
    return %c0_i32, %c0_i32_0 : i32, i32
  }
  func.func @transform_2(%arg0: i32) -> (i32, i32) {
    %c0_i32 = arith.constant 0 : i32
    %c0_i32_0 = arith.constant 0 : i32
    %c0_i32_1 = arith.constant 0 : i32
    return %c0_i32, %c0_i32_0 : i32, i32
  }
  func.func @transform_3(%arg0: i32) -> (i32, i32) {
    %c0_i32 = arith.constant 0 : i32
    %c0_i32_0 = arith.constant 0 : i32
    %c0_i32_1 = arith.constant 0 : i32
    return %c0_i32, %c0_i32_0 : i32, i32
  }
  func.func @transform_4(%arg0: i32) -> (i32, i32) {
    %c0_i32 = arith.constant 0 : i32
    %c0_i32_0 = arith.constant 0 : i32
    %c0_i32_1 = arith.constant 0 : i32
    return %c0_i32, %c0_i32_0 : i32, i32
  }
  func.func @transform_5(%arg0: i32) -> (i32, i32) {
    %c0_i32 = arith.constant 0 : i32
    %c0_i32_0 = arith.constant 0 : i32
    return %arg0, %c0_i32 : i32, i32
  }
}

</mosaic_0001>

<llo_original>
// kernel: tpu_custom_call.1
$region0: #{tpu_custom_call.1}
  #allocation0 [shape = 'u32[]', space=smem, size = 0x4, offset = 0x4, fixed_abs, tag = 'smem constant byte address 0x4 - core index']
  #allocation1 [shape = 'u32[72,128]{1,0:T(1,128)}', space=vmem, size = 0x9000, scoped, tag = 'internal scratch']
  %s0 = inlined_call_operand.hbm [shape: f32[8,128], index: 0, kind: input, shape index: {}]
  %s1 = inlined_call_operand.hbm [shape: f32[8,128], index: 1, kind: output, shape index: {}]
  %s2 = sld [smem:[#allocation0]]
  $region41: #{tpu_custom_call.1} parent=0
    _
  %s4 = ssub.s32 1, %s2
  %s5 = scalar_select 0, %s4, %s2
  $region1: #{tpu_custom_call.1} parent=0
    #allocation2 [shape = 'u8[4096]{0}', space=vmem, size = 0x1000, scoped, tag = 'input window, operand 0, single buffered']
    #allocation3 [shape = 's32[2]{0}', space=sflag, size = 0x8, scoped, tag = 'scoped memory for tpu_custom_call.1']
    #allocation4 [shape = 's32[2]{0}', space=sflag, size = 0x8, scoped, tag = 'scoped memory for tpu_custom_call.1']
    #allocation5 [shape = 'u8[4096]{0}', space=vmem, size = 0x1000, scoped, tag = 'output window, operand 0, single buffered']
    %6 = vsyncpa [#allocation3], 0
    %7 = vsyncpa [#allocation4], 0
    loop: start=0, step=1, limit=4
    $region2: #{tpu_custom_call.1} parent=1 // loop_pre_header
      _
    $region3: #{tpu_custom_call.1} parent=1 // loop_header
      %s9 = sphi 0, %s13
      %p10 = scmp.ge.s32.totalorder %s9, 4
      %s17 = sphi 0, %s17
      %s19 = sphi 0, %s17
      %s20 = sphi 0, %s19
      %s34 = sphi 0, %s20
      %s38 = sphi 0, %s38
      %s40 = sphi 0, %s38
      %s41 = sphi 0, %s40
      %s55 = sphi 0, %s41
    $region4: #{tpu_custom_call.1} parent=1 // loop_header_branch
      %12 = sbr.rel (%p10) target = $region8
    $region5: #{tpu_custom_call.1} parent=1 // loop_body
      %s14 = ssub.s32 %s9, 1
      %s15 = ssub.s32 %s9, 2
      %s16 = sadd.s32 %s9, 1
      %s18 = sadd.s32 %s17, 1
      %p21 = scmp.eq.s32.totalorder %s9, 1
      %p22 = scmp.ne.s32.totalorder %s17, %s19
      %p23 = scmp.eq.s32.totalorder %s9, 0
      %p24 = por %p22, %p23
      %p25 = scmp.ne.s32.totalorder %s17, %s19
      %p26 = scmp.eq.s32.totalorder %s14, 1
      %p27 = por %p25, %p26
      %p28 = scmp.ne.s32.totalorder %s19, %s20
      %p29 = scmp.eq.s32.totalorder %s14, 0
      %p30 = por %p28, %p29
      %p31 = scmp.ne.s32.totalorder %s19, %s20
      %p32 = scmp.eq.s32.totalorder %s15, 1
      %p33 = por %p31, %p32
      %p35 = scmp.ne.s32.totalorder %s20, %s34
      %p36 = scmp.eq.s32.totalorder %s15, 0
      %p37 = por %p35, %p36
      %s39 = sadd.s32 %s38, 1
      %p42 = scmp.eq.s32.totalorder %s9, 1
      %p43 = scmp.ne.s32.totalorder %s38, %s40
      %p44 = scmp.eq.s32.totalorder %s9, 0
      %p45 = por %p43, %p44
      %p46 = scmp.ne.s32.totalorder %s38, %s40
      %p47 = scmp.eq.s32.totalorder %s14, 1
      %p48 = por %p46, %p47
      %p49 = scmp.ne.s32.totalorder %s40, %s41
      %p50 = scmp.eq.s32.totalorder %s14, 0
      %p51 = por %p49, %p50
      %p52 = scmp.ne.s32.totalorder %s40, %s41
      %p53 = scmp.eq.s32.totalorder %s15, 1
      %p54 = por %p52, %p53
      %p56 = scmp.ne.s32.totalorder %s41, %s55
      %p57 = scmp.eq.s32.totalorder %s15, 0
      %p58 = por %p56, %p57
      %p59 = scmp.le.s32.totalorder 1, %s9
      %p60 = scmp.lt.s32.totalorder %s9, 3
      %p61 = pnand %p59, %p60
      %p62 = pneg %p61
      // Predicated region
      $region9: #{tpu_custom_call.1} parent=5 // pred_check
        _
      $region10: #{tpu_custom_call.1} parent=5 // pred_check_branch
        %64 = sbr.rel (%p61) target = $region12
      $region11: #{tpu_custom_call.1} parent=5 // pred_region
        %s65 = ssub.s32 %s9, 1
        // Predicated region
        $region13: #{tpu_custom_call.1} parent=11 // pred_check
          %p66 = pneg %p30
        $region14: #{tpu_custom_call.1} parent=11 // pred_check_branch
          %68 = sbr.rel (%p66) target = $region16
        $region15: #{tpu_custom_call.1} parent=11 // pred_region
          %70 = vsyncadd [#allocation3], 0
          %s72 = sshll.u32 %s0, 4
          %s73 = int_to_ptr.hbm [resolvable:$true] %s72
          %s74 = sshll.u32 [#allocation2], 4
          %s75 = int_to_ptr.vmem [resolvable:$true] %s74
          %77 = dma.hbm_to_vmem [thread:$0]  %s73, 128, %s75, [#allocation3]
        $region16: #{tpu_custom_call.1} parent=11 // pred_fallthru
          _
      $region12: #{tpu_custom_call.1} parent=5 // pred_fallthru
        _
      %p78 = scmp.lt.s32.totalorder %s9, 2
      // Predicated region
      $region17: #{tpu_custom_call.1} parent=5 // pred_check
        %p79 = pneg %p78
      $region18: #{tpu_custom_call.1} parent=5 // pred_check_branch
        %81 = sbr.rel (%p79) target = $region20
      $region19: #{tpu_custom_call.1} parent=5 // pred_region
        _
      $region20: #{tpu_custom_call.1} parent=5 // pred_fallthru
        _
      %p82 = scmp.le.s32.totalorder 1, %s9
      %p83 = scmp.lt.s32.totalorder %s9, 3
      %p84 = pnand %p82, %p83
      %p85 = pneg %p84
      // Predicated region
      $region21: #{tpu_custom_call.1} parent=5 // pred_check
        _
      $region22: #{tpu_custom_call.1} parent=5 // pred_check_branch
        %87 = sbr.rel (%p84) target = $region24
      $region23: #{tpu_custom_call.1} parent=5 // pred_region
        %s88 = ssub.s32 %s9, 1
        // Predicated region
        $region25: #{tpu_custom_call.1} parent=23 // pred_check
          %p89 = pneg %p30
        $region26: #{tpu_custom_call.1} parent=23 // pred_check_branch
          %91 = sbr.rel (%p89) target = $region28
        $region27: #{tpu_custom_call.1} parent=23 // pred_region
          %93 = dma.done [#allocation3], 128
        $region28: #{tpu_custom_call.1} parent=23 // pred_fallthru
          _
        %p94 = pneg %p30
        %p95 = pneg %p27
        %p96 = pneg %p51
        %p97 = pneg %p48
        %v98 = vld [vmem:[#allocation2] sm:$0xff]
        %99 = vst [vmem:[#allocation5] sm:$0xff] %v98
        // Predicated region
        $region29: #{tpu_custom_call.1} parent=23 // pred_check
          %p100 = pneg %p48
        $region30: #{tpu_custom_call.1} parent=23 // pred_check_branch
          %102 = sbr.rel (%p100) target = $region32
        $region31: #{tpu_custom_call.1} parent=23 // pred_region
          %104 = vsyncadd [#allocation4], 0
          %s106 = sshll.u32 [#allocation5], 4
          %s107 = int_to_ptr.vmem [resolvable:$true] %s106
          %s108 = sshll.u32 %s1, 4
          %s109 = int_to_ptr.hbm [resolvable:$true] %s108
          %111 = dma.vmem_to_hbm [thread:$0]  %s107, 128, %s109, [#allocation4]
        $region32: #{tpu_custom_call.1} parent=23 // pred_fallthru
          _
        // Predicated region
        $region33: #{tpu_custom_call.1} parent=23 // pred_check
          %p112 = pneg %p48
        $region34: #{tpu_custom_call.1} parent=23 // pred_check_branch
          %114 = sbr.rel (%p112) target = $region36
        $region35: #{tpu_custom_call.1} parent=23 // pred_region
          %116 = dma.done [#allocation4], 128
        $region36: #{tpu_custom_call.1} parent=23 // pred_fallthru
          _
      $region24: #{tpu_custom_call.1} parent=5 // pred_fallthru
        _
      %p117 = scmp.le.s32.totalorder 2, %s9
      // Predicated region
      $region37: #{tpu_custom_call.1} parent=5 // pred_check
        %p118 = pneg %p117
      $region38: #{tpu_custom_call.1} parent=5 // pred_check_branch
        %120 = sbr.rel (%p118) target = $region40
      $region39: #{tpu_custom_call.1} parent=5 // pred_region
        %s121 = ssub.s32 %s9, 2
      $region40: #{tpu_custom_call.1} parent=5 // pred_fallthru
        _
    $region6: #{tpu_custom_call.1} parent=1 // loop_footer
      %s13 = sadd.s32 1, %s9
    $region7: #{tpu_custom_call.1} parent=1 // loop_footer_branch
      %8 = sbr.rel target = $region3
    $region8: #{tpu_custom_call.1} parent=1 // loop_exit
      _
    %122 = vsyncpa [#allocation3], 1
    %s123 = scalar_lea.sflag [#allocation3], 1
    %124 = vsyncpa %s123, 1
    %125 = vsyncpa [#allocation4], 1
    %s126 = scalar_lea.sflag [#allocation4], 1
    %127 = vsyncpa %s126, 1

// kernel: _mlp_impl.1
$region0: #{_mlp_impl.1}
  #allocation0 [shape = 'u32[]', space=smem, size = 0x4, offset = 0x4, fixed_abs, tag = 'smem constant byte address 0x4 - core index']
  #allocation1 [shape = 'u32[72,128]{1,0:T(1,128)}', space=vmem, size = 0x9000, scoped, tag = 'internal scratch']
  %s0 = inlined_call_operand.vmem [shape: bf16[16,128], index: 0, kind: input, shape index: {}]
  %s1 = inlined_call_operand.vmem [shape: bf16[128,128], index: 1, kind: input, shape index: {}]
  %s2 = inlined_call_operand.vmem [shape: f32[1,128], index: 2, kind: input, shape index: {}]
  %s3 = inlined_call_operand.vmem [shape: bf16[128,128], index: 3, kind: input, shape index: {}]
  %s4 = inlined_call_operand.vmem [shape: f32[1,128], index: 4, kind: input, shape index: {}]
  %s5 = inlined_call_operand.hbm [shape: f32[16,128], index: 5, kind: output, shape index: {}]
  %s6 = sld [smem:[#allocation0]]
  $region30: #{_mlp_impl.1} parent=0
    _
  %s8 = ssub.s32 1, %s6
  %s9 = scalar_select 0, %s8, %s6
  $region1: #{_mlp_impl.1} parent=0
    #allocation2 [shape = 'u8[8192]{0}', space=vmem, size = 0x2000, scoped, tag = 'output window, operand 0, single buffered']
    #allocation3 [shape = 's32[1]{0}', space=sflag, size = 0x4, scoped, tag = 'scoped memory for _mlp_impl.1']
    %10 = vsyncpa [#allocation3], 0
    // Predicated region
    $region2: #{_mlp_impl.1} parent=1 // pred_check
      _
    $region3: #{_mlp_impl.1} parent=1 // pred_check_branch
      %12 = sbr.rel (0) target = $region5
    $region4: #{_mlp_impl.1} parent=1 // pred_region
      _
    $region5: #{_mlp_impl.1} parent=1 // pred_fallthru
      _
    // Predicated region
    $region6: #{_mlp_impl.1} parent=1 // pred_check
      _
    $region7: #{_mlp_impl.1} parent=1 // pred_check_branch
      %14 = sbr.rel (0) target = $region9
    $region8: #{_mlp_impl.1} parent=1 // pred_region
      _
    $region9: #{_mlp_impl.1} parent=1 // pred_fallthru
      _
    // Predicated region
    $region10: #{_mlp_impl.1} parent=1 // pred_check
      _
    $region11: #{_mlp_impl.1} parent=1 // pred_check_branch
      %16 = sbr.rel (0) target = $region13
    $region12: #{_mlp_impl.1} parent=1 // pred_region
      _
    $region13: #{_mlp_impl.1} parent=1 // pred_fallthru
      _
    // Predicated region
    $region14: #{_mlp_impl.1} parent=1 // pred_check
      _
    $region15: #{_mlp_impl.1} parent=1 // pred_check_branch
      %18 = sbr.rel (0) target = $region17
    $region16: #{_mlp_impl.1} parent=1 // pred_region
      _
    $region17: #{_mlp_impl.1} parent=1 // pred_fallthru
      _
    // Predicated region
    $region18: #{_mlp_impl.1} parent=1 // pred_check
      _
    $region19: #{_mlp_impl.1} parent=1 // pred_check_branch
      %20 = sbr.rel (0) target = $region21
    $region20: #{_mlp_impl.1} parent=1 // pred_region
      _
    $region21: #{_mlp_impl.1} parent=1 // pred_fallthru
      _
    %v21 = vld [vmem:[%s0] sm:$0xf]
    %v22 = vld [vmem:[%s0 + $0x4] sm:$0xf]
    %v23 = vld [vmem:[%s1] sm:$0xf]
    %v24 = vld [vmem:[%s1 + $0x4] sm:$0xf]
    %v25 = vld [vmem:[%s1 + $0x8] sm:$0xf]
    %v26 = vld [vmem:[%s1 + $0xc] sm:$0xf]
    %v27 = vld [vmem:[%s1 + $0x10] sm:$0xf]
    %v28 = vld [vmem:[%s1 + $0x14] sm:$0xf]
    %v29 = vld [vmem:[%s1 + $0x18] sm:$0xf]
    %v30 = vld [vmem:[%s1 + $0x1c] sm:$0xf]
    %v31 = vld [vmem:[%s1 + $0x20] sm:$0xf]
    %v32 = vld [vmem:[%s1 + $0x24] sm:$0xf]
    %v33 = vld [vmem:[%s1 + $0x28] sm:$0xf]
    %v34 = vld [vmem:[%s1 + $0x2c] sm:$0xf]
    %v35 = vld [vmem:[%s1 + $0x30] sm:$0xf]
    %v36 = vld [vmem:[%s1 + $0x34] sm:$0xf]
    %v37 = vld [vmem:[%s1 + $0x38] sm:$0xf]
    %v38 = vld [vmem:[%s1 + $0x3c] sm:$0xf]
    %v39 = vld [vmem:[%s2] sm:$0x1]
    %v41 = vperm.slane %v39, 0
    %v45 = vunpack.c.l.b16 %v21
    %v46 = vunpack.c.l.b16 %v22
    %v47 = vpack.c.b16 %v46, %v45
    %v65 = vunpack.c.l.b16 %v23
    %v66 = vunpack.c.l.b16 %v24
    %v67 = vunpack.c.l.b16 %v25
    %v68 = vunpack.c.l.b16 %v26
    %v69 = vunpack.c.l.b16 %v27
    %v70 = vunpack.c.l.b16 %v28
    %v71 = vunpack.c.l.b16 %v29
    %v72 = vunpack.c.l.b16 %v30
    %v73 = vunpack.c.l.b16 %v31
    %v74 = vunpack.c.l.b16 %v32
    %v75 = vunpack.c.l.b16 %v33
    %v76 = vunpack.c.l.b16 %v34
    %v77 = vunpack.c.l.b16 %v35
    %v78 = vunpack.c.l.b16 %v36
    %v79 = vunpack.c.l.b16 %v37
    %v80 = vunpack.c.l.b16 %v38
    %v81 = vpack.c.b16 %v66, %v65
    %v82 = vpack.c.b16 %v68, %v67
    %v83 = vpack.c.b16 %v70, %v69
    %v84 = vpack.c.b16 %v72, %v71
    %v85 = vpack.c.b16 %v74, %v73
    %v86 = vpack.c.b16 %v76, %v75
    %v87 = vpack.c.b16 %v78, %v77
    %v88 = vpack.c.b16 %v80, %v79
    %97 = vmatpush.bf16.msra.mxu0 %v88
    %98 = vmatpush.bf16.msra.mxu0 %v87
    %99 = vmatpush.bf16.msra.mxu0 %v86
    %100 = vmatpush.bf16.msra.mxu0 %v85
    %101 = vmatpush.bf16.msra.mxu0 %v84
    %102 = vmatpush.bf16.msra.mxu0 %v83
    %103 = vmatpush.bf16.msra.mxu0 %v82
    %104 = vmatpush.bf16.msra.mxu0 %v81
    %105 = vmatmul.bf16.gmra.mxu0 %v47
    %v106 = vpop.f32.mrf.mxu0
    %v107 = vadd.f32 %v41, %v106
    %v108 = vpop.f32.mrf.mxu0
    %v109 = vadd.f32 %v41, %v108
    %110 = vdwg.mxu0
    %v111 = vmul.f32 %v107, 0.5
    %v112 = vmul.f32 %v109, 0.5
    %v113 = vmul.f32 %v107, 0.044715
    %v114 = vmul.f32 %v109, 0.044715
    %v115 = vmul.f32 %v113, %v107
    %v116 = vmul.f32 %v114, %v109
    %v117 = vmul.f32 %v115, %v107
    %v118 = vmul.f32 %v116, %v109
    %v119 = vadd.f32 %v107, %v117
    %v120 = vadd.f32 %v109, %v118
    %v121 = vmul.f32 %v119, 0.7978846
    %v122 = vmul.f32 %v120, 0.7978846
    %v123 = vtanh.pop %v121
    %v124 = vtanh.pop %v122
    %v125 = vadd.f32 %v123, 1.0
    %v126 = vadd.f32 %v124, 1.0
    %v127 = vmul.f32 %v111, %v125
    %v128 = vmul.f32 %v112, %v126
    %v129 = vpack.c.bf16 %v128, %v127
    %v130 = vld [vmem:[%s3] sm:$0xf]
    %v131 = vld [vmem:[%s3 + $0x4] sm:$0xf]
    %v132 = vld [vmem:[%s3 + $0x8] sm:$0xf]
    %v133 = vld [vmem:[%s3 + $0xc] sm:$0xf]
    %v134 = vld [vmem:[%s3 + $0x10] sm:$0xf]
    %v135 = vld [vmem:[%s3 + $0x14] sm:$0xf]
    %v136 = vld [vmem:[%s3 + $0x18] sm:$0xf]
    %v137 = vld [vmem:[%s3 + $0x1c] sm:$0xf]
    %v138 = vld [vmem:[%s3 + $0x20] sm:$0xf]
    %v139 = vld [vmem:[%s3 + $0x24] sm:$0xf]
    %v140 = vld [vmem:[%s3 + $0x28] sm:$0xf]
    %v141 = vld [vmem:[%s3 + $0x2c] sm:$0xf]
    %v142 = vld [vmem:[%s3 + $0x30] sm:$0xf]
    %v143 = vld [vmem:[%s3 + $0x34] sm:$0xf]
    %v144 = vld [vmem:[%s3 + $0x38] sm:$0xf]
    %v145 = vld [vmem:[%s3 + $0x3c] sm:$0xf]
    %v146 = vld [vmem:[%s4] sm:$0x1]
    %v148 = vperm.slane %v146, 0
    %v166 = vunpack.c.l.b16 %v130
    %v167 = vunpack.c.l.b16 %v131
    %v168 = vunpack.c.l.b16 %v132
    %v169 = vunpack.c.l.b16 %v133
    %v170 = vunpack.c.l.b16 %v134
    %v171 = vunpack.c.l.b16 %v135
    %v172 = vunpack.c.l.b16 %v136
    %v173 = vunpack.c.l.b16 %v137
    %v174 = vunpack.c.l.b16 %v138
    %v175 = vunpack.c.l.b16 %v139
    %v176 = vunpack.c.l.b16 %v140
    %v177 = vunpack.c.l.b16 %v141
    %v178 = vunpack.c.l.b16 %v142
    %v179 = vunpack.c.l.b16 %v143
    %v180 = vunpack.c.l.b16 %v144
    %v181 = vunpack.c.l.b16 %v145
    %v182 = vpack.c.b16 %v167, %v166
    %v183 = vpack.c.b16 %v169, %v168
    %v184 = vpack.c.b16 %v171, %v170
    %v185 = vpack.c.b16 %v173, %v172
    %v186 = vpack.c.b16 %v175, %v174
    %v187 = vpack.c.b16 %v177, %v176
    %v188 = vpack.c.b16 %v179, %v178
    %v189 = vpack.c.b16 %v181, %v180
    %198 = vmatpush.bf16.msra.mxu0 %v189
    %199 = vmatpush.bf16.msra.mxu0 %v188
    %200 = vmatpush.bf16.msra.mxu0 %v187
    %201 = vmatpush.bf16.msra.mxu0 %v186
    %202 = vmatpush.bf16.msra.mxu0 %v185
    %203 = vmatpush.bf16.msra.mxu0 %v184
    %204 = vmatpush.bf16.msra.mxu0 %v183
    %205 = vmatpush.bf16.msra.mxu0 %v182
    %206 = vmatmul.bf16.gmra.mxu0 %v129
    %v207 = vpop.f32.mrf.mxu0
    %v208 = vadd.f32 %v148, %v207
    %v209 = vpop.f32.mrf.mxu0
    %v210 = vadd.f32 %v148, %v209
    %211 = vdwg.mxu0
    %212 = vst [vmem:[#allocation2] sm:$0xff] %v208
    %213 = vst [vmem:[#allocation2 + $0x8] sm:$0xff] %v210
    // Predicated region
    $region22: #{_mlp_impl.1} parent=1 // pred_check
      _
    $region23: #{_mlp_impl.1} parent=1 // pred_check_branch
      %215 = sbr.rel (0) target = $region25
    $region24: #{_mlp_impl.1} parent=1 // pred_region
      %217 = vsyncadd [#allocation3], 0
      %s218 = sshll.u32 [#allocation2], 4
      %s219 = int_to_ptr.vmem [resolvable:$true] %s218
      %s220 = sshll.u32 %s5, 4
      %s221 = int_to_ptr.hbm [resolvable:$true] %s220
      %226 = dma.vmem_to_hbm [thread:$0]  %s219, 256, %s221, [#allocation3], 128, 128, 8
    $region25: #{_mlp_impl.1} parent=1 // pred_fallthru
      _
    // Predicated region
    $region26: #{_mlp_impl.1} parent=1 // pred_check
      _
    $region27: #{_mlp_impl.1} parent=1 // pred_check_branch
      %228 = sbr.rel (0) target = $region29
    $region28: #{_mlp_impl.1} parent=1 // pred_region
      %230 = dma.done [#allocation3], 256
    $region29: #{_mlp_impl.1} parent=1 // pred_fallthru
      _
    %231 = vsyncpa [#allocation3], 1

</llo_original>
